<compile_context>
chip_gen: v5e
topology: v5e:2x2
jax: 0.10.0
libtpu: 0.0.40
codegen_flags: <defaults>
</compile_context>

<pallas_src>
import functools

import jax
import jax.numpy as jnp
from jax.experimental import pallas as pl
from jax.experimental.pallas import tpu as pltpu

LANE = 128  # TPU lane width: pad feature dims of the weights to this.


def _round_up(x: int, m: int) -> int:
    return ((x + m - 1) // m) * m


def _dqn_kernel(x_ref, w1_ref, b1_ref, w2_ref, b2_ref, w3_ref, b3_ref, o_ref,
                *, out_f: int):
    # One batch tile; whole 3-layer MLP fused in VMEM.
    # x_ref: (TM, IN) f32; w*: bf16 (lane-padded); b*: f32; o_ref: (TM, out_f) f32.
    x = x_ref[...].astype(jnp.bfloat16)

    # Layer 1: Linear + ReLU (f32 accumulate, bf16 for the next MXU pass).
    h1 = jnp.dot(x, w1_ref[...], preferred_element_type=jnp.float32) + b1_ref[...]
    h1 = jnp.maximum(h1, 0.0).astype(jnp.bfloat16)

    # Layer 2: Linear + ReLU.
    h2 = jnp.dot(h1, w2_ref[...], preferred_element_type=jnp.float32) + b2_ref[...]
    h2 = jnp.maximum(h2, 0.0).astype(jnp.bfloat16)

    # Layer 3: Linear (Q-values).  Only the real out_f lanes go back to HBM
    # (masked vst; same vreg/store-slot count, ~32x less writeback than a
    # 128-lane-padded f32 output).
    q = jnp.dot(h2, w3_ref[...], preferred_element_type=jnp.float32) + b3_ref[...]
    o_ref[...] = q[:, :out_f]


# Constant-index weight/bias blocks are DMA'd once and stay VMEM-resident;
# Buffered(1) skips the useless second pipeline buffer for these operands.
_RESIDENT_KW = {"pipeline_mode": pl.Buffered(1)} if hasattr(pl, "Buffered") else {}


def _resident_spec(shape):
    return pl.BlockSpec(shape, lambda i: (0, 0), **_RESIDENT_KW)


def prepare_params(params):
    """Pad feature dims to 128 lanes and cast weights to bf16 ONCE.

    Hoisted out of the per-call path: for a 64-wide MLP these half-dozen small
    XLA pad/scatter/cast ops would otherwise dominate end-to-end latency.
    Padded columns carry exact zeros through the whole net, so results are
    unchanged.  Re-run after every parameter update.
    """
    w1, b1 = params["w1"], params["b1"]
    w2, b2 = params["w2"], params["b2"]
    w3, b3 = params["w3"], params["b3"]

    in_f, hidden = w1.shape
    out_f = w3.shape[1]
    h_pad = _round_up(hidden, LANE)
    out_pad = _round_up(out_f, LANE)

    bf, f32 = jnp.bfloat16, jnp.float32
    return {
        "w1": jnp.zeros((in_f, h_pad), bf).at[:, :hidden].set(w1.astype(bf)),
        "b1": jnp.zeros((1, h_pad), f32).at[:, :hidden].set(b1.astype(f32)),
        "w2": jnp.zeros((h_pad, h_pad), bf).at[:hidden, :hidden].set(w2.astype(bf)),
        "b2": jnp.zeros((1, h_pad), f32).at[:, :hidden].set(b2.astype(f32)),
        "w3": jnp.zeros((h_pad, out_pad), bf).at[:hidden, :out_f].set(w3.astype(bf)),
        "b3": jnp.zeros((1, out_pad), f32).at[:, :out_f].set(b3.astype(f32)),
        "out_features": out_f,  # static python int
    }


def _pick_tile(batch: int, tile_m: int) -> int:
    # Fewer, fatter grid steps amortize the ~0.35us/step overhead.  Round to 16
    # (bf16 sublane pack) to avoid packed-layout edge cases on tiny batches.
    tm = min(tile_m, _round_up(batch, 16))
    # v7x has two TensorCores: guarantee >=2 grid steps for mid/large batches
    # so dimension_semantics=("parallel",) can actually shard across them.
    # Costs one extra ~0.35us step on single-TC v5e/v6e -- negligible.
    if batch > 256 and batch <= tm:
        tm = _round_up(pl.cdiv(batch, 2), 16)
    return tm


def simple_dqn_forward(state, prepared, *, tile_m: int = 4096):
    """state: (B, in_features) f32; prepared: output of prepare_params().
    Returns (B, out_features) f32 Q-values."""
    B, in_f = state.shape
    h_pad = prepared["w1"].shape[1]
    out_pad = prepared["w3"].shape[1]
    out_f = prepared["out_features"]

    tm = _pick_tile(B, tile_m)
    # Partial last tile is fine: rows are independent and Pallas masks
    # out-of-bounds output rows on store.
    grid = (pl.cdiv(B, tm),)

    kernel = functools.partial(_dqn_kernel, out_f=out_f)
    return pl.pallas_call(
        kernel,
        out_shape=jax.ShapeDtypeStruct((B, out_f), jnp.float32),
        grid=grid,
        in_specs=[
            pl.BlockSpec((tm, in_f), lambda i: (i, 0)),  # state: tiled over batch
            _resident_spec((in_f, h_pad)),               # w1
            _resident_spec((1, h_pad)),                  # b1
            _resident_spec((h_pad, h_pad)),              # w2
            _resident_spec((1, h_pad)),                  # b2
            _resident_spec((h_pad, out_pad)),            # w3
            _resident_spec((1, out_pad)),                # b3
        ],
        out_specs=pl.BlockSpec((tm, out_f), lambda i: (i, 0)),
        compiler_params=pltpu.CompilerParams(
            dimension_semantics=("parallel",),  # shards across v7x dual-TC; ~0 delta elsewhere
        ),
    )(state, prepared["w1"], prepared["b1"], prepared["w2"], prepared["b2"],
      prepared["w3"], prepared["b3"])


def init_params(key, in_features, out_features, hidden=64):
    """Deterministic init mirroring torch.nn.Linear (uniform +-1/sqrt(fan_in)).

    Weights stored as (fan_in, fan_out) so the kernel does x @ W.
    Biases stored as (1, fan_out) for clean 2-D broadcasting in VMEM.
    """
    def linear(k, fan_in, fan_out):
        kw, kb = jax.random.split(k)
        bound = 1.0 / jnp.sqrt(jnp.float32(fan_in))
        w = jax.random.uniform(kw, (fan_in, fan_out), jnp.float32, -bound, bound)
        b = jax.random.uniform(kb, (1, fan_out), jnp.float32, -bound, bound)
        return w, b

    k1, k2, k3 = jax.random.split(key, 3)
    w1, b1 = linear(k1, in_features, hidden)
    w2, b2 = linear(k2, hidden, hidden)
    w3, b3 = linear(k3, hidden, out_features)
    return {"w1": w1, "b1": b1, "w2": w2, "b2": b2, "w3": w3, "b3": b3}


def _reference(state, p):
    """Pure-JAX reference mirroring the kernel numerics (bf16 in, f32 accumulate)."""
    cast = lambda a: a.astype(jnp.bfloat16)
    h1 = jnp.maximum(
        jnp.dot(cast(state), cast(p["w1"]), preferred_element_type=jnp.float32) + p["b1"], 0.0)
    h2 = jnp.maximum(
        jnp.dot(cast(h1), cast(p["w2"]), preferred_element_type=jnp.float32) + p["b2"], 0.0)
    return jnp.dot(cast(h2), cast(p["w3"]), preferred_element_type=jnp.float32) + p["b3"]


if __name__ == "__main__":
    in_features, out_features, hidden = 16, 4, 64

    key = jax.random.PRNGKey(0)
    k_params, k_state = jax.random.split(key)

    params = init_params(k_params, in_features, out_features, hidden)
    prepared = prepare_params(params)  # one-time pad/cast (hoisted out of forward)

    # Tiny batch (single partial tile) and a larger batch (multi-step grid with
    # a partial last tile) to exercise both paths.
    for batch in (8, 1000):
        k_state, sub = jax.random.split(k_state)
        state = jax.random.normal(sub, (batch, in_features), jnp.float32)

        q_vals = jax.block_until_ready(simple_dqn_forward(state, prepared))
        ref = _reference(state, params)

        assert q_vals.shape == (batch, out_features)
        assert jnp.allclose(q_vals, ref, atol=2e-2, rtol=2e-2), (
            batch, float(jnp.max(jnp.abs(q_vals - ref))))

    print("KERNEL_OK")
</pallas_src>

<mosaic_0001>
module attributes {stable_mosaic.version = 11 : i64} {
  func.func @_dqn_kernel(%arg0: i32, %arg1: memref<16x16xf32, #tpu.memory_space<vmem>>, %arg2: memref<16x128xbf16, #tpu.memory_space<vmem>>, %arg3: memref<1x128xf32, #tpu.memory_space<vmem>>, %arg4: memref<128x128xbf16, #tpu.memory_space<vmem>>, %arg5: memref<1x128xf32, #tpu.memory_space<vmem>>, %arg6: memref<128x128xbf16, #tpu.memory_space<vmem>>, %arg7: memref<1x128xf32, #tpu.memory_space<vmem>>, %arg8: memref<16x4xf32, #tpu.memory_space<vmem>>) attributes {dimension_semantics = [#tpu.dimension_semantics<parallel>], iteration_bounds = array<i64: 1>, scalar_prefetch = 0 : i64, scratch_operands = 0 : i64, tpu.core_type = #tpu.core_type<tc>, window_params = [{transform_indices = @transform_0, window_bounds = array<i64: 16, 16>}, {pipeline_mode = #tpu.pipeline_mode<synchronous>, transform_indices = @transform_1, window_bounds = array<i64: 16, 128>}, {pipeline_mode = #tpu.pipeline_mode<synchronous>, transform_indices = @transform_2, window_bounds = array<i64: 1, 128>}, {pipeline_mode = #tpu.pipeline_mode<synchronous>, transform_indices = @transform_3, window_bounds = array<i64: 128, 128>}, {pipeline_mode = #tpu.pipeline_mode<synchronous>, transform_indices = @transform_4, window_bounds = array<i64: 1, 128>}, {pipeline_mode = #tpu.pipeline_mode<synchronous>, transform_indices = @transform_5, window_bounds = array<i64: 128, 128>}, {pipeline_mode = #tpu.pipeline_mode<synchronous>, transform_indices = @transform_6, window_bounds = array<i64: 1, 128>}, {transform_indices = @transform_7, window_bounds = array<i64: 16, 4>}]} {
    %c0 = arith.constant 0 : index
    %c0_0 = arith.constant 0 : index
    %0 = vector.load %arg1[%c0, %c0_0] : memref<16x16xf32, #tpu.memory_space<vmem>>, vector<16x16xf32>
    %1 = arith.truncf %0 : vector<16x16xf32> to vector<16x16xbf16>
    %c0_1 = arith.constant 0 : index
    %c0_2 = arith.constant 0 : index
    %2 = vector.load %arg2[%c0_1, %c0_2] : memref<16x128xbf16, #tpu.memory_space<vmem>>, vector<16x128xbf16>
    %cst = arith.constant dense<0.000000e+00> : vector<16x128xf32>
    %3 = tpu.matmul %1, %2, %cst {dimension_numbers = #tpu.dot_dimension_numbers<[1], [0], [0], [1], [0, 0, 1, 1], [], []>} : vector<16x16xbf16>, vector<16x128xbf16>, vector<16x128xf32> -> vector<16x128xf32>
    %c0_3 = arith.constant 0 : index
    %c0_4 = arith.constant 0 : index
    %4 = vector.load %arg3[%c0_3, %c0_4] : memref<1x128xf32, #tpu.memory_space<vmem>>, vector<1x128xf32>
    %5 = vector.broadcast %4 : vector<1x128xf32> to vector<16x128xf32>
    %6 = arith.addf %3, %5 : vector<16x128xf32>
    %cst_5 = arith.constant 0.000000e+00 : f32
    %7 = vector.broadcast %cst_5 : f32 to vector<16x128xf32>
    %8 = arith.maximumf %6, %7 : vector<16x128xf32>
    %9 = arith.truncf %8 : vector<16x128xf32> to vector<16x128xbf16>
    %c0_6 = arith.constant 0 : index
    %c0_7 = arith.constant 0 : index
    %10 = vector.load %arg4[%c0_6, %c0_7] : memref<128x128xbf16, #tpu.memory_space<vmem>>, vector<128x128xbf16>
    %cst_8 = arith.constant dense<0.000000e+00> : vector<16x128xf32>
    %11 = tpu.matmul %9, %10, %cst_8 {dimension_numbers = #tpu.dot_dimension_numbers<[1], [0], [0], [1], [0, 0, 1, 1], [], []>} : vector<16x128xbf16>, vector<128x128xbf16>, vector<16x128xf32> -> vector<16x128xf32>
    %c0_9 = arith.constant 0 : index
    %c0_10 = arith.constant 0 : index
    %12 = vector.load %arg5[%c0_9, %c0_10] : memref<1x128xf32, #tpu.memory_space<vmem>>, vector<1x128xf32>
    %13 = vector.broadcast %12 : vector<1x128xf32> to vector<16x128xf32>
    %14 = arith.addf %11, %13 : vector<16x128xf32>
    %cst_11 = arith.constant 0.000000e+00 : f32
    %15 = vector.broadcast %cst_11 : f32 to vector<16x128xf32>
    %16 = arith.maximumf %14, %15 : vector<16x128xf32>
    %17 = arith.truncf %16 : vector<16x128xf32> to vector<16x128xbf16>
    %c0_12 = arith.constant 0 : index
    %c0_13 = arith.constant 0 : index
    %18 = vector.load %arg6[%c0_12, %c0_13] : memref<128x128xbf16, #tpu.memory_space<vmem>>, vector<128x128xbf16>
    %cst_14 = arith.constant dense<0.000000e+00> : vector<16x128xf32>
    %19 = tpu.matmul %17, %18, %cst_14 {dimension_numbers = #tpu.dot_dimension_numbers<[1], [0], [0], [1], [0, 0, 1, 1], [], []>} : vector<16x128xbf16>, vector<128x128xbf16>, vector<16x128xf32> -> vector<16x128xf32>
    %c0_15 = arith.constant 0 : index
    %c0_16 = arith.constant 0 : index
    %20 = vector.load %arg7[%c0_15, %c0_16] : memref<1x128xf32, #tpu.memory_space<vmem>>, vector<1x128xf32>
    %21 = vector.broadcast %20 : vector<1x128xf32> to vector<16x128xf32>
    %22 = arith.addf %19, %21 : vector<16x128xf32>
    %23 = vector.extract_strided_slice %22 {offsets = [0, 0], sizes = [16, 4], strides = [1, 1]} : vector<16x128xf32> to vector<16x4xf32>
    %c0_17 = arith.constant 0 : index
    %c0_18 = arith.constant 0 : index
    %24 = vector.load %arg8[%c0_17, %c0_18] : memref<16x4xf32, #tpu.memory_space<vmem>>, vector<16x4xf32>
    tpu.vector_store %arg8[%c0_17, %c0_18], %23 {strides = array<i32>} : memref<16x4xf32, #tpu.memory_space<vmem>>, vector<16x4xf32>,
    return
  }
  func.func @transform_0(%arg0: i32) -> (i32, i32) {
    %c0_i32 = arith.constant 0 : i32
    %c0_i32_0 = arith.constant 0 : i32
    return %arg0, %c0_i32 : i32, i32
  }
  func.func @transform_1(%arg0: i32) -> (i32, i32) {
    %c0_i32 = arith.constant 0 : i32
    %c0_i32_0 = arith.constant 0 : i32
    %c0_i32_1 = arith.constant 0 : i32
    return %c0_i32, %c0_i32_0 : i32, i32
  }
  func.func @transform_2(%arg0: i32) -> (i32, i32) {
    %c0_i32 = arith.constant 0 : i32
    %c0_i32_0 = arith.constant 0 : i32
    %c0_i32_1 = arith.constant 0 : i32
    return %c0_i32, %c0_i32_0 : i32, i32
  }
  func.func @transform_3(%arg0: i32) -> (i32, i32) {
    %c0_i32 = arith.constant 0 : i32
    %c0_i32_0 = arith.constant 0 : i32
    %c0_i32_1 = arith.constant 0 : i32
    return %c0_i32, %c0_i32_0 : i32, i32
  }
  func.func @transform_4(%arg0: i32) -> (i32, i32) {
    %c0_i32 = arith.constant 0 : i32
    %c0_i32_0 = arith.constant 0 : i32
    %c0_i32_1 = arith.constant 0 : i32
    return %c0_i32, %c0_i32_0 : i32, i32
  }
  func.func @transform_5(%arg0: i32) -> (i32, i32) {
    %c0_i32 = arith.constant 0 : i32
    %c0_i32_0 = arith.constant 0 : i32
    %c0_i32_1 = arith.constant 0 : i32
    return %c0_i32, %c0_i32_0 : i32, i32
  }
  func.func @transform_6(%arg0: i32) -> (i32, i32) {
    %c0_i32 = arith.constant 0 : i32
    %c0_i32_0 = arith.constant 0 : i32
    %c0_i32_1 = arith.constant 0 : i32
    return %c0_i32, %c0_i32_0 : i32, i32
  }
  func.func @transform_7(%arg0: i32) -> (i32, i32) {
    %c0_i32 = arith.constant 0 : i32
    %c0_i32_0 = arith.constant 0 : i32
    return %arg0, %c0_i32 : i32, i32
  }
}

</mosaic_0001>

<llo_original>
// kernel: tpu_custom_call.1
$region0: #{tpu_custom_call.1}
  #allocation0 [shape = 'u32[]', space=smem, size = 0x4, offset = 0x4, fixed_abs, tag = 'smem constant byte address 0x4 - core index']
  #allocation1 [shape = 'u32[72,128]{1,0:T(1,128)}', space=vmem, size = 0x9000, scoped, tag = 'internal scratch']
  %s0 = inlined_call_operand.hbm [shape: f32[8,16], index: 0, kind: input, shape index: {}]
  %s1 = inlined_call_operand.hbm [shape: bf16[16,128], index: 1, kind: input, shape index: {}]
  %s2 = inlined_call_operand.vmem [shape: f32[1,128], index: 2, kind: input, shape index: {}]
  %s3 = inlined_call_operand.hbm [shape: bf16[128,128], index: 3, kind: input, shape index: {}]
  %s4 = inlined_call_operand.vmem [shape: f32[1,128], index: 4, kind: input, shape index: {}]
  %s5 = inlined_call_operand.hbm [shape: bf16[128,128], index: 5, kind: input, shape index: {}]
  %s6 = inlined_call_operand.vmem [shape: f32[1,128], index: 6, kind: input, shape index: {}]
  %s7 = inlined_call_operand.vmem [shape: f32[8,4], index: 7, kind: output, shape index: {}]
  %s8 = sld [smem:[#allocation0]]
  $region88: #{tpu_custom_call.1} parent=0
    _
  %s10 = ssub.s32 1, %s8
  %s11 = scalar_select 0, %s10, %s8
  $region1: #{tpu_custom_call.1} parent=0
    #allocation2 [shape = 'u8[8192]{0}', space=vmem, size = 0x2000, scoped, tag = 'input window, operand 0, single buffered']
    #allocation3 [shape = 's32[1]{0}', space=sflag, size = 0x4, scoped, tag = 'scoped memory for tpu_custom_call.1']
    #allocation4 [shape = 'u8[4096]{0}', space=vmem, size = 0x1000, scoped, tag = 'input window, operand 1, single buffered']
    #allocation5 [shape = 's32[1]{0}', space=sflag, size = 0x4, scoped, tag = 'scoped memory for tpu_custom_call.1']
    #allocation6 [shape = 'u8[32768]{0}', space=vmem, size = 0x8000, scoped, tag = 'input window, operand 3, single buffered']
    #allocation7 [shape = 'u8[32768]{0}', space=vmem, size = 0x8000, scoped, tag = 'input window, operand 5, single buffered']
    #allocation8 [shape = 's32[1]{0}', space=sflag, size = 0x4, scoped, tag = 'scoped memory for tpu_custom_call.1']
    #allocation9 [shape = 'u8[8192]{0}', space=vmem, size = 0x2000, scoped, tag = 'output window, operand 0, single buffered']
    %12 = vsyncpa [#allocation3], 0
    %13 = vsyncpa [#allocation5], 0
    %14 = vsyncpa [#allocation8], 0
    // Predicated region
    $region2: #{tpu_custom_call.1} parent=1 // pred_check
      _
    $region3: #{tpu_custom_call.1} parent=1 // pred_check_branch
      %16 = sbr.rel (0) target = $region5
    $region4: #{tpu_custom_call.1} parent=1 // pred_region
      %18 = vsyncadd [#allocation3], 128
      %s19 = sshll.u32 %s0, 4
      %s20 = int_to_ptr.hbm [resolvable:$true] %s19
      %s21 = sshll.u32 [#allocation2], 4
      %s22 = int_to_ptr.vmem [resolvable:$true] %s21
      %27 = dma.hbm_to_vmem [thread:$0]  %s20, 128, %s22, [#allocation3], 128, 128, 8
    $region5: #{tpu_custom_call.1} parent=1 // pred_fallthru
      _
    // Predicated region
    $region6: #{tpu_custom_call.1} parent=1 // pred_check
      _
    $region7: #{tpu_custom_call.1} parent=1 // pred_check_branch
      %29 = sbr.rel (0) target = $region9
    $region8: #{tpu_custom_call.1} parent=1 // pred_region
      %31 = vsyncadd [#allocation5], 0
      %s32 = sshll.u32 %s1, 4
      %s33 = int_to_ptr.hbm [resolvable:$true] %s32
      %s34 = sshll.u32 [#allocation4], 4
      %s35 = int_to_ptr.vmem [resolvable:$true] %s34
      %40 = dma.hbm_to_vmem [thread:$0]  %s33, 128, %s35, [#allocation5], 64, 64, 4
    $region9: #{tpu_custom_call.1} parent=1 // pred_fallthru
      _
    // Predicated region
    $region10: #{tpu_custom_call.1} parent=1 // pred_check
      _
    $region11: #{tpu_custom_call.1} parent=1 // pred_check_branch
      %42 = sbr.rel (0) target = $region13
    $region12: #{tpu_custom_call.1} parent=1 // pred_region
      _
    $region13: #{tpu_custom_call.1} parent=1 // pred_fallthru
      _
    // Predicated region
    $region14: #{tpu_custom_call.1} parent=1 // pred_check
      _
    $region15: #{tpu_custom_call.1} parent=1 // pred_check_branch
      %44 = sbr.rel (0) target = $region17
    $region16: #{tpu_custom_call.1} parent=1 // pred_region
      %46 = vsyncadd [#allocation5], 0
      %s47 = sshll.u32 %s3, 4
      %s48 = int_to_ptr.hbm [resolvable:$true] %s47
      %s49 = sshll.u32 [#allocation6], 4
      %s50 = int_to_ptr.vmem [resolvable:$true] %s49
      %55 = dma.hbm_to_vmem [thread:$0]  %s48, 1024, %s50, [#allocation5], 64, 64, 4
    $region17: #{tpu_custom_call.1} parent=1 // pred_fallthru
      _
    // Predicated region
    $region18: #{tpu_custom_call.1} parent=1 // pred_check
      _
    $region19: #{tpu_custom_call.1} parent=1 // pred_check_branch
      %57 = sbr.rel (0) target = $region21
    $region20: #{tpu_custom_call.1} parent=1 // pred_region
      _
    $region21: #{tpu_custom_call.1} parent=1 // pred_fallthru
      _
    // Predicated region
    $region22: #{tpu_custom_call.1} parent=1 // pred_check
      _
    $region23: #{tpu_custom_call.1} parent=1 // pred_check_branch
      %59 = sbr.rel (0) target = $region25
    $region24: #{tpu_custom_call.1} parent=1 // pred_region
      %61 = vsyncadd [#allocation8], 0
      %s62 = sshll.u32 %s5, 4
      %s63 = int_to_ptr.hbm [resolvable:$true] %s62
      %s64 = sshll.u32 [#allocation7], 4
      %s65 = int_to_ptr.vmem [resolvable:$true] %s64
      %70 = dma.hbm_to_vmem [thread:$0]  %s63, 1024, %s65, [#allocation8], 64, 64, 4
    $region25: #{tpu_custom_call.1} parent=1 // pred_fallthru
      _
    // Predicated region
    $region26: #{tpu_custom_call.1} parent=1 // pred_check
      _
    $region27: #{tpu_custom_call.1} parent=1 // pred_check_branch
      %72 = sbr.rel (0) target = $region29
    $region28: #{tpu_custom_call.1} parent=1 // pred_region
      _
    $region29: #{tpu_custom_call.1} parent=1 // pred_fallthru
      _
    // Predicated region
    $region30: #{tpu_custom_call.1} parent=1 // pred_check
      _
    $region31: #{tpu_custom_call.1} parent=1 // pred_check_branch
      %74 = sbr.rel (0) target = $region33
    $region32: #{tpu_custom_call.1} parent=1 // pred_region
      %76 = dma.done [#allocation3], 256
    $region33: #{tpu_custom_call.1} parent=1 // pred_fallthru
      _
    // Predicated region
    $region34: #{tpu_custom_call.1} parent=1 // pred_check
      _
    $region35: #{tpu_custom_call.1} parent=1 // pred_check_branch
      %78 = sbr.rel (0) target = $region37
    $region36: #{tpu_custom_call.1} parent=1 // pred_region
      %80 = dma.done [#allocation5], 128
    $region37: #{tpu_custom_call.1} parent=1 // pred_fallthru
      _
    // Predicated region
    $region38: #{tpu_custom_call.1} parent=1 // pred_check
      _
    $region39: #{tpu_custom_call.1} parent=1 // pred_check_branch
      %82 = sbr.rel (0) target = $region41
    $region40: #{tpu_custom_call.1} parent=1 // pred_region
      %84 = dma.done [#allocation5], 1024
    $region41: #{tpu_custom_call.1} parent=1 // pred_fallthru
      _
    // Predicated region
    $region42: #{tpu_custom_call.1} parent=1 // pred_check
      _
    $region43: #{tpu_custom_call.1} parent=1 // pred_check_branch
      %86 = sbr.rel (0) target = $region45
    $region44: #{tpu_custom_call.1} parent=1 // pred_region
      %88 = dma.done [#allocation8], 1024
    $region45: #{tpu_custom_call.1} parent=1 // pred_fallthru
      _
    %v90 = vld [vmem:[#allocation2] sm:$0xff]
    %v91 = vld [vmem:[#allocation2 + $0x8] sm:$0xff]
    %v92 = vpack.c.bf16 %v91, %v90
    %v93 = vld [vmem:[#allocation4] sm:$0xf]
    %v94 = vld [vmem:[#allocation4 + $0x4] sm:$0xf]
    %v95 = vld [vmem:[%s2] sm:$0x1]
    %v97 = vperm.slane %v95, 0
    %v101 = vunpack.c.l.b16 %v93
    %v102 = vunpack.c.l.b16 %v94
    %v103 = vpack.c.b16 %v102, %v101
    %vm105 = vcmask 130048
    %v107 = vsel %vm105, %v92, 0
    %109 = vmatpush.bf16.msra.mxu0 0
    %110 = vmatpush.bf16.msra.mxu0 0
    %111 = vmatpush.bf16.msra.mxu0 0
    %112 = vmatpush.bf16.msra.mxu0 0
    %113 = vmatpush.bf16.msra.mxu0 0
    %114 = vmatpush.bf16.msra.mxu0 0
    %115 = vmatpush.bf16.msra.mxu0 0
    %116 = vmatpush.bf16.msra.mxu0 %v103
    %117 = vmatmul.bf16.gmra.mxu0 %v107
    %v118 = vpop.f32.mrf.mxu0
    %v119 = vadd.f32 %v97, %v118
    %v120 = vpop.f32.mrf.mxu0
    %v121 = vadd.f32 %v97, %v120
    %122 = vdwg.mxu0
    %v123 = vmax.f32 %v119, 0.0
    %v124 = vmax.f32 %v121, 0.0
    %v125 = vpack.c.bf16 %v124, %v123
    %v126 = vld [vmem:[#allocation6] sm:$0xf]
    %v127 = vld [vmem:[#allocation6 + $0x4] sm:$0xf]
    %v128 = vld [vmem:[#allocation6 + $0x8] sm:$0xf]
    %v129 = vld [vmem:[#allocation6 + $0xc] sm:$0xf]
    %v130 = vld [vmem:[#allocation6 + $0x10] sm:$0xf]
    %v131 = vld [vmem:[#allocation6 + $0x14] sm:$0xf]
    %v132 = vld [vmem:[#allocation6 + $0x18] sm:$0xf]
    %v133 = vld [vmem:[#allocation6 + $0x1c] sm:$0xf]
    %v134 = vld [vmem:[#allocation6 + $0x20] sm:$0xf]
    %v135 = vld [vmem:[#allocation6 + $0x24] sm:$0xf]
    %v136 = vld [vmem:[#allocation6 + $0x28] sm:$0xf]
    %v137 = vld [vmem:[#allocation6 + $0x2c] sm:$0xf]
    %v138 = vld [vmem:[#allocation6 + $0x30] sm:$0xf]
    %v139 = vld [vmem:[#allocation6 + $0x34] sm:$0xf]
    %v140 = vld [vmem:[#allocation6 + $0x38] sm:$0xf]
    %v141 = vld [vmem:[#allocation6 + $0x3c] sm:$0xf]
    %v142 = vld [vmem:[%s4] sm:$0x1]
    %v144 = vperm.slane %v142, 0
    %v162 = vunpack.c.l.b16 %v126
    %v163 = vunpack.c.l.b16 %v127
    %v164 = vunpack.c.l.b16 %v128
    %v165 = vunpack.c.l.b16 %v129
    %v166 = vunpack.c.l.b16 %v130
    %v167 = vunpack.c.l.b16 %v131
    %v168 = vunpack.c.l.b16 %v132
    %v169 = vunpack.c.l.b16 %v133
    %v170 = vunpack.c.l.b16 %v134
    %v171 = vunpack.c.l.b16 %v135
    %v172 = vunpack.c.l.b16 %v136
    %v173 = vunpack.c.l.b16 %v137
    %v174 = vunpack.c.l.b16 %v138
    %v175 = vunpack.c.l.b16 %v139
    %v176 = vunpack.c.l.b16 %v140
    %v177 = vunpack.c.l.b16 %v141
    %v178 = vpack.c.b16 %v163, %v162
    %v179 = vpack.c.b16 %v165, %v164
    %v180 = vpack.c.b16 %v167, %v166
    %v181 = vpack.c.b16 %v169, %v168
    %v182 = vpack.c.b16 %v171, %v170
    %v183 = vpack.c.b16 %v173, %v172
    %v184 = vpack.c.b16 %v175, %v174
    %v185 = vpack.c.b16 %v177, %v176
    %194 = vmatpush.bf16.msra.mxu0 %v185
    %195 = vmatpush.bf16.msra.mxu0 %v184
    %196 = vmatpush.bf16.msra.mxu0 %v183
    %197 = vmatpush.bf16.msra.mxu0 %v182
    %198 = vmatpush.bf16.msra.mxu0 %v181
    %199 = vmatpush.bf16.msra.mxu0 %v180
    %200 = vmatpush.bf16.msra.mxu0 %v179
    %201 = vmatpush.bf16.msra.mxu0 %v178
    %202 = vmatmul.bf16.gmra.mxu0 %v125
    %v203 = vpop.f32.mrf.mxu0
    %v204 = vadd.f32 %v144, %v203
    %v205 = vpop.f32.mrf.mxu0
    %v206 = vadd.f32 %v144, %v205
    %207 = vdwg.mxu0
    %v208 = vmax.f32 %v204, 0.0
    %v209 = vmax.f32 %v206, 0.0
    %v210 = vpack.c.bf16 %v209, %v208
    %v211 = vld [vmem:[#allocation7] sm:$0xf]
    %v212 = vld [vmem:[#allocation7 + $0x4] sm:$0xf]
    %v213 = vld [vmem:[#allocation7 + $0x8] sm:$0xf]
    %v214 = vld [vmem:[#allocation7 + $0xc] sm:$0xf]
    %v215 = vld [vmem:[#allocation7 + $0x10] sm:$0xf]
    %v216 = vld [vmem:[#allocation7 + $0x14] sm:$0xf]
    %v217 = vld [vmem:[#allocation7 + $0x18] sm:$0xf]
    %v218 = vld [vmem:[#allocation7 + $0x1c] sm:$0xf]
    %v219 = vld [vmem:[#allocation7 + $0x20] sm:$0xf]
    %v220 = vld [vmem:[#allocation7 + $0x24] sm:$0xf]
    %v221 = vld [vmem:[#allocation7 + $0x28] sm:$0xf]
    %v222 = vld [vmem:[#allocation7 + $0x2c] sm:$0xf]
    %v223 = vld [vmem:[#allocation7 + $0x30] sm:$0xf]
    %v224 = vld [vmem:[#allocation7 + $0x34] sm:$0xf]
    %v225 = vld [vmem:[#allocation7 + $0x38] sm:$0xf]
    %v226 = vld [vmem:[#allocation7 + $0x3c] sm:$0xf]
    %v227 = vld [vmem:[%s6] sm:$0x1]
    %v229 = vperm.slane %v227, 0
    %v247 = vunpack.c.l.b16 %v211
    %v248 = vunpack.c.l.b16 %v212
    %v249 = vunpack.c.l.b16 %v213
    %v250 = vunpack.c.l.b16 %v214
    %v251 = vunpack.c.l.b16 %v215
    %v252 = vunpack.c.l.b16 %v216
    %v253 = vunpack.c.l.b16 %v217
    %v254 = vunpack.c.l.b16 %v218
    %v255 = vunpack.c.l.b16 %v219
    %v256 = vunpack.c.l.b16 %v220
    %v257 = vunpack.c.l.b16 %v221
    %v258 = vunpack.c.l.b16 %v222
    %v259 = vunpack.c.l.b16 %v223
    %v260 = vunpack.c.l.b16 %v224
    %v261 = vunpack.c.l.b16 %v225
    %v262 = vunpack.c.l.b16 %v226
    %v263 = vpack.c.b16 %v248, %v247
    %v264 = vpack.c.b16 %v250, %v249
    %v265 = vpack.c.b16 %v252, %v251
    %v266 = vpack.c.b16 %v254, %v253
    %v267 = vpack.c.b16 %v256, %v255
    %v268 = vpack.c.b16 %v258, %v257
    %v269 = vpack.c.b16 %v260, %v259
    %v270 = vpack.c.b16 %v262, %v261
    %279 = vmatpush.bf16.msra.mxu0 %v270
    %280 = vmatpush.bf16.msra.mxu0 %v269
    %281 = vmatpush.bf16.msra.mxu0 %v268
    %282 = vmatpush.bf16.msra.mxu0 %v267
    %283 = vmatpush.bf16.msra.mxu0 %v266
    %284 = vmatpush.bf16.msra.mxu0 %v265
    %285 = vmatpush.bf16.msra.mxu0 %v264
    %286 = vmatpush.bf16.msra.mxu0 %v263
    %287 = vmatmul.bf16.gmra.mxu0 %v210
    %v288 = vpop.f32.mrf.mxu0
    %v289 = vadd.f32 %v229, %v288
    %v290 = vpop.f32.mrf.mxu0
    %v291 = vadd.f32 %v229, %v290
    %292 = vdwg.mxu0
    %vm293 = vcmask 31744
    %294 = vst.msk [vmem:[#allocation9] sm:$0xff] %vm293, %v289
    %295 = vst.msk [vmem:[#allocation9 + $0x8] sm:$0xff] %vm293, %v291
    // Predicated region
    $region46: #{tpu_custom_call.1} parent=1 // pred_check
      _
    $region47: #{tpu_custom_call.1} parent=1 // pred_check_branch
      %297 = sbr.rel (0) target = $region49
    $region48: #{tpu_custom_call.1} parent=1 // pred_region
      // Predicated region
      $region50: #{tpu_custom_call.1} parent=48 // pred_check
        _
      $region51: #{tpu_custom_call.1} parent=48 // pred_check_branch
        %299 = sbr.rel (0) target = $region53
      $region52: #{tpu_custom_call.1} parent=48 // pred_region
        // Predicated region
        $region54: #{tpu_custom_call.1} parent=52 // pred_check
          _
        $region55: #{tpu_custom_call.1} parent=52 // pred_check_branch
          %301 = sbr.rel (0) target = $region57
        $region56: #{tpu_custom_call.1} parent=52 // pred_region
          // Predicated region
          $region69: #{tpu_custom_call.1} parent=56 // pred_check
            _
          $region70: #{tpu_custom_call.1} parent=56 // pred_check_branch
            %317 = sbr.rel (0) target = $region72
          $region71: #{tpu_custom_call.1} parent=56 // pred_region
            loop: start=0, step=1, limit=1
            $region73: #{tpu_custom_call.1} parent=71 // loop_pre_header
              _
            $region74: #{tpu_custom_call.1} parent=71 // loop_header
              %s319 = sphi 0, %s323
              %p320 = scmp.ge.s32.totalorder %s319, 1
              %s324 = sphi [#allocation9], [#allocation9]
              %s325 = sphi %s7, %s7
            $region75: #{tpu_custom_call.1} parent=71 // loop_header_branch
              %322 = sbr.rel (%p320) target = $region79
            $region76: #{tpu_custom_call.1} parent=71 // loop_body
              %v326 = vld [vmem:[%s324] sm:$0xff]
              %327 = vst [vmem:[%s325] sm:$0xff] %v326
            $region77: #{tpu_custom_call.1} parent=71 // loop_footer
              %s323 = sadd.s32 1, %s319
            $region78: #{tpu_custom_call.1} parent=71 // loop_footer_branch
              %318 = sbr.rel target = $region74
            $region79: #{tpu_custom_call.1} parent=71 // loop_exit
              _
          $region72: #{tpu_custom_call.1} parent=56 // pred_fallthru
            _
          // Predicated region
          $region80: #{tpu_custom_call.1} parent=56 // pred_check
            _
          $region81: #{tpu_custom_call.1} parent=56 // pred_check_branch
            %329 = sbr.rel target = $region83
          $region82: #{tpu_custom_call.1} parent=56 // pred_region
            _
          $region83: #{tpu_custom_call.1} parent=56 // pred_fallthru
            _
        $region57: #{tpu_custom_call.1} parent=52 // pred_fallthru
          _
        // Predicated region
        $region58: #{tpu_custom_call.1} parent=52 // pred_check
          _
        $region59: #{tpu_custom_call.1} parent=52 // pred_check_branch
          %303 = sbr.rel target = $region61
        $region60: #{tpu_custom_call.1} parent=52 // pred_region
          %s305 = ssub.s32 256, 1
          loop: start=0, step=1, limit=1
          $region62: #{tpu_custom_call.1} parent=60 // loop_pre_header
            _
          $region63: #{tpu_custom_call.1} parent=60 // loop_header
            %s307 = sphi 0, %s311
            %p308 = scmp.ge.s32.totalorder %s307, 1
            %s312 = sphi [#allocation9], [#allocation9]
            %s313 = sphi %s7, %s7
          $region64: #{tpu_custom_call.1} parent=60 // loop_header_branch
            %310 = sbr.rel (%p308) target = $region68
          $region65: #{tpu_custom_call.1} parent=60 // loop_body
            %v314 = vld [vmem:[%s312] sm:%s305]
            %315 = vst [vmem:[%s313] sm:%s305] %v314
          $region66: #{tpu_custom_call.1} parent=60 // loop_footer
            %s311 = sadd.s32 1, %s307
          $region67: #{tpu_custom_call.1} parent=60 // loop_footer_branch
            %306 = sbr.rel target = $region63
          $region68: #{tpu_custom_call.1} parent=60 // loop_exit
            _
        $region61: #{tpu_custom_call.1} parent=52 // pred_fallthru
          _
      $region53: #{tpu_custom_call.1} parent=48 // pred_fallthru
        _
      %330 = vnop
    $region49: #{tpu_custom_call.1} parent=1 // pred_fallthru
      _
    // Predicated region
    $region84: #{tpu_custom_call.1} parent=1 // pred_check
      _
    $region85: #{tpu_custom_call.1} parent=1 // pred_check_branch
      %332 = sbr.rel (0) target = $region87
    $region86: #{tpu_custom_call.1} parent=1 // pred_region
      _
    $region87: #{tpu_custom_call.1} parent=1 // pred_fallthru
      _
    %333 = vsyncpa [#allocation3], 1
    %334 = vsyncpa [#allocation5], 1
    %335 = vsyncpa [#allocation8], 1

</llo_original>
